<compile_context>
chip_gen: v6e
topology: v6e:2x2x1
jax: 0.10.0
libtpu: 0.0.40
codegen_flags: <defaults>
</compile_context>

<pallas_src>
import functools

import jax
import jax.numpy as jnp
from jax.experimental import pallas as pl
from jax.experimental.pallas import tpu as pltpu

NUM_EMOTIONS = 28          # len(EMOTION_VA_MAP)
RECOVERY_RATE = 0.1
ENERGY_LOSS_SCALE = 0.01
FATIGUE_FRAC = 0.2


def _round_up(x, m):
    return (x + m - 1) // m * m


def _modulate_kernel(scale_ref, x_ref, bias_ref, y_ref):
    """One (tile_b, H) row tile:  y = x * scale + bias_row  (pure FMA, lane-dense)."""
    scale = scale_ref[0]                                   # f32: modulation * fatigue
    x = x_ref[...].astype(jnp.float32)                     # (tile_b, H)
    bias = bias_ref[...].astype(jnp.float32)               # (1, H) -> sublane broadcast
    y_ref[...] = (x * scale + bias).astype(y_ref.dtype)


@functools.partial(jax.jit, static_argnames=("tile_b",))
def emotional_energy_forward(x, emotion_embedding, emotion_idx,
                             valence, arousal, intensity, energy, max_energy,
                             tile_b=None):
    """Pallas forward for EmotionalEnergyModel (tensor input path).

    x:                  (B, H) float32 (or bfloat16)
    emotion_embedding:  (NUM_EMOTIONS, H)  nn.Embedding weight
    emotion_idx:        int32 scalar; -1 means "no current emotion"
    valence/arousal/intensity/energy/max_energy: f32 scalars (device data)
    Returns (y, new_energy).
    """
    B, H = x.shape

    valence = jnp.asarray(valence, jnp.float32)
    arousal = jnp.asarray(arousal, jnp.float32)
    intensity = jnp.asarray(intensity, jnp.float32)
    energy = jnp.asarray(energy, jnp.float32)
    max_energy = jnp.asarray(max_energy, jnp.float32)
    emotion_idx = jnp.asarray(emotion_idx, jnp.int32)

    # ---- hoisted scalar math (emotion index / gate are data -> single trace) ----
    gate = (emotion_idx >= 0).astype(jnp.float32)
    modulation = 1.0 + valence * jax.nn.sigmoid(arousal)
    add_scale = gate * intensity                                   # 0 if "no emotion"
    idx_clamped = jnp.clip(emotion_idx, 0, NUM_EMOTIONS - 1)
    emb_row = emotion_embedding[idx_clamped].astype(jnp.float32)   # (H,) pre-gathered

    # ---- analytic ||y||^2 from reductions of x (one fused XLA pass over x) ----
    # ||y||^2 = mod^2 * (||x||^2 + 2*s*(colsum(x)·e) + B*s^2*||e||^2)
    x32 = x.astype(jnp.float32)
    sumsq_x = jnp.sum(x32 * x32)
    colsum_x = jnp.sum(x32, axis=0)                                # (H,)
    cross = jnp.dot(colsum_x, emb_row)
    emb_sq = jnp.dot(emb_row, emb_row)
    inner = sumsq_x + 2.0 * add_scale * cross + B * add_scale * add_scale * emb_sq
    norm = jnp.abs(modulation) * jnp.sqrt(jnp.maximum(inner, 0.0))

    # ---- EnergyModule scalar update (fatigue now known BEFORE the Pallas pass) ----
    energy_loss = norm * ENERGY_LOSS_SCALE * (1.0 + intensity)
    new_energy = energy - energy_loss
    recovery = RECOVERY_RATE * (1.0 + valence) * (max_energy - new_energy)
    new_energy = jnp.where(valence > 0.0,
                           jnp.minimum(new_energy + recovery, max_energy),
                           new_energy)
    threshold = FATIGUE_FRAC * max_energy
    fatigue = jnp.where(new_energy < threshold, new_energy / threshold, 1.0)

    scale = (modulation * fatigue).astype(jnp.float32).reshape(1)          # (1,) SMEM
    bias_row = (add_scale * modulation * fatigue) * emb_row                # (H,) f32

    # ---- lane-dense output: pad H to a 128 multiple only when needed ----
    h_pad = _round_up(H, 128)
    x_in = x
    if h_pad != H:
        x_in = jnp.pad(x, ((0, 0), (0, h_pad - H)))
        bias_row = jnp.pad(bias_row, (0, h_pad - H))
    bias = bias_row.reshape(1, h_pad)

    # ---- tile sizing by bytes: double-buffered (x + y) tiles ~6 MiB ----
    itemsize = x.dtype.itemsize
    per_row_bytes = h_pad * 2 * itemsize              # one row of x tile + y tile
    budget = 6 << 20                                  # 2 * tile * per_row <= budget
    max_rows = max(8, (budget // (2 * per_row_bytes)) // 8 * 8)
    rows_cap = _round_up(B, 8)
    if B > 8:
        # >=2 grid steps so the "parallel" axis can feed both v7x TensorCores.
        rows_cap = min(rows_cap, _round_up(pl.cdiv(B, 2), 8))
    t = max_rows if tile_b is None else int(tile_b)
    t = max(8, (min(t, max_rows, rows_cap) // 8) * 8)
    nb = pl.cdiv(B, t)

    # Explicit VMEM budget: 2x double-buffered x+y tiles + bias + slack.
    vmem_need = 2 * (2 * t * h_pad * itemsize) + 8 * h_pad * 4 + (1 << 20)
    vmem_limit = int(min(max(vmem_need, 4 << 20), 30 << 20))

    y = pl.pallas_call(
        _modulate_kernel,
        out_shape=jax.ShapeDtypeStruct((B, h_pad), x.dtype),
        grid_spec=pltpu.PrefetchScalarGridSpec(
            num_scalar_prefetch=0,
            grid=(nb,),
            in_specs=[
                pl.BlockSpec(memory_space=pltpu.MemorySpace.SMEM),   # scale scalar
                pl.BlockSpec((t, h_pad), lambda i: (i, 0)),          # x tile
                pl.BlockSpec((1, h_pad), lambda i: (0, 0)),          # bias row
            ],
            out_specs=pl.BlockSpec((t, h_pad), lambda i: (i, 0)),    # y tile
        ),
        compiler_params=pltpu.CompilerParams(
            dimension_semantics=("parallel",),      # independent tiles
            vmem_limit_bytes=vmem_limit),
    )(scale, x_in, bias)

    if h_pad != H:
        y = y[:, :H]
    return y, new_energy


def _reference(x, emotion_embedding, current_emotion_idx,
               valence, arousal, intensity, energy, max_energy):
    arousal_gain = jax.nn.sigmoid(jnp.float32(arousal))
    modulation = 1.0 + valence * arousal_gain
    if current_emotion_idx is not None:
        x = x + emotion_embedding[current_emotion_idx][None, :] * intensity
    y = x * modulation
    norm = jnp.linalg.norm(y)
    energy_loss = norm * ENERGY_LOSS_SCALE * (1.0 + intensity)
    new_energy = energy - energy_loss
    if valence > 0:
        recovery = RECOVERY_RATE * (1.0 + valence) * (max_energy - new_energy)
        new_energy = jnp.minimum(new_energy + recovery, max_energy)
    thr = FATIGUE_FRAC * max_energy
    y = jnp.where(new_energy < thr, y * (new_energy / thr), y)
    return y, new_energy


if __name__ == "__main__":
    key = jax.random.PRNGKey(0)
    k_x, k_emb = jax.random.split(key)

    # Small shapes; B deliberately not a multiple of the tile / of 8 to exercise the
    # ragged-last-block path.  hidden_dim = 128 (lane-dense).
    B, H = 52, 128
    x = jax.random.normal(k_x, (B, H), dtype=jnp.float32)
    emotion_embedding = jax.random.normal(k_emb, (NUM_EMOTIONS, H),
                                          dtype=jnp.float32) * 0.1

    # --- case 1: 'joy' (idx 17, v=0.8, a=0.6), explicit small tile -> 4 grid steps ---
    y, e = emotional_energy_forward(
        x, emotion_embedding, jnp.int32(17), 0.8, 0.6, 0.7, 100.0, 100.0, tile_b=16)
    jax.block_until_ready((y, e))
    y_ref, e_ref = _reference(x, emotion_embedding, 17, 0.8, 0.6, 0.7, 100.0, 100.0)
    assert jnp.allclose(y, y_ref, atol=1e-4, rtol=1e-4), "output mismatch (joy)"
    assert jnp.allclose(e, e_ref, atol=1e-3, rtol=1e-4), "energy mismatch (joy)"

    # --- case 2: no current emotion (idx = -1), auto tile size ---
    y2, e2 = emotional_energy_forward(
        x, emotion_embedding, jnp.int32(-1), 0.8, 0.6, 0.7, 100.0, 100.0)
    jax.block_until_ready((y2, e2))
    y2_ref, e2_ref = _reference(x, emotion_embedding, None, 0.8, 0.6, 0.7, 100.0, 100.0)
    assert jnp.allclose(y2, y2_ref, atol=1e-4, rtol=1e-4), "output mismatch (no emotion)"
    assert jnp.allclose(e2, e2_ref, atol=1e-3, rtol=1e-4), "energy mismatch (no emotion)"

    # --- case 3: 'sadness' (idx 25, v=-0.7, a=-0.3), low energy -> fatigue active ---
    y3, e3 = emotional_energy_forward(
        x, emotion_embedding, jnp.int32(25), -0.7, -0.3, 0.7, 10.0, 100.0)
    jax.block_until_ready((y3, e3))
    y3_ref, e3_ref = _reference(x, emotion_embedding, 25, -0.7, -0.3, 0.7, 10.0, 100.0)
    assert jnp.allclose(y3, y3_ref, atol=1e-4, rtol=1e-4), "output mismatch (fatigue)"
    assert jnp.allclose(e3, e3_ref, atol=1e-3, rtol=1e-4), "energy mismatch (fatigue)"

    print("KERNEL_OK")
</pallas_src>

<mosaic_0001>
module attributes {stable_mosaic.version = 11 : i64} {
  func.func @_modulate_kernel(%arg0: i32, %arg1: memref<1xf32, #tpu.memory_space<smem>>, %arg2: memref<16x128xf32, #tpu.memory_space<vmem>>, %arg3: memref<1x128xf32, #tpu.memory_space<vmem>>, %arg4: memref<16x128xf32, #tpu.memory_space<vmem>>) attributes {dimension_semantics = [#tpu.dimension_semantics<parallel>], iteration_bounds = array<i64: 4>, scalar_prefetch = 0 : i64, scratch_operands = 0 : i64, tpu.core_type = #tpu.core_type<tc>, window_params = [{transform_indices = @transform_0, window_bounds = array<i64: 1>}, {transform_indices = @transform_1, window_bounds = array<i64: 16, 128>}, {pipeline_mode = #tpu.pipeline_mode<synchronous>, transform_indices = @transform_2, window_bounds = array<i64: 1, 128>}, {transform_indices = @transform_3, window_bounds = array<i64: 16, 128>}]} {
    %c0 = arith.constant 0 : index
    %0 = memref.load %arg1[%c0] : memref<1xf32, #tpu.memory_space<smem>>
    %c0_0 = arith.constant 0 : index
    %c0_1 = arith.constant 0 : index
    %1 = vector.load %arg2[%c0_0, %c0_1] : memref<16x128xf32, #tpu.memory_space<vmem>>, vector<16x128xf32>
    %c0_2 = arith.constant 0 : index
    %c0_3 = arith.constant 0 : index
    %2 = vector.load %arg3[%c0_2, %c0_3] : memref<1x128xf32, #tpu.memory_space<vmem>>, vector<1x128xf32>
    %3 = vector.broadcast %0 : f32 to vector<16x128xf32>
    %4 = arith.mulf %1, %3 : vector<16x128xf32>
    %5 = vector.broadcast %2 : vector<1x128xf32> to vector<16x128xf32>
    %6 = arith.addf %4, %5 : vector<16x128xf32>
    %c0_4 = arith.constant 0 : index
    %c0_5 = arith.constant 0 : index
    %7 = vector.load %arg4[%c0_4, %c0_5] : memref<16x128xf32, #tpu.memory_space<vmem>>, vector<16x128xf32>
    tpu.vector_store %arg4[%c0_4, %c0_5], %6 {strides = array<i32>} : memref<16x128xf32, #tpu.memory_space<vmem>>, vector<16x128xf32>,
    return
  }
  func.func @transform_0(%arg0: i32) -> i32 {
    %c0_i32 = arith.constant 0 : i32
    %c0_i32_0 = arith.constant 0 : i32
    return %c0_i32 : i32
  }
  func.func @transform_1(%arg0: i32) -> (i32, i32) {
    %c0_i32 = arith.constant 0 : i32
    %c0_i32_0 = arith.constant 0 : i32
    return %arg0, %c0_i32 : i32, i32
  }
  func.func @transform_2(%arg0: i32) -> (i32, i32) {
    %c0_i32 = arith.constant 0 : i32
    %c0_i32_0 = arith.constant 0 : i32
    %c0_i32_1 = arith.constant 0 : i32
    return %c0_i32, %c0_i32_0 : i32, i32
  }
  func.func @transform_3(%arg0: i32) -> (i32, i32) {
    %c0_i32 = arith.constant 0 : i32
    %c0_i32_0 = arith.constant 0 : i32
    return %arg0, %c0_i32 : i32, i32
  }
}

</mosaic_0001>

<llo_original>
// kernel: emotional_energy_forward.1
$region0: #{emotional_energy_forward.1}
  #allocation0 [shape = 'u32[]', space=smem, size = 0x4, offset = 0x4, fixed_abs, tag = 'smem constant byte address 0x4 - core index']
  #allocation1 [shape = 'u32[144,128]{1,0:T(1,128)}', space=vmem, size = 0x12000, scoped, tag = 'internal scratch']
  #allocation2 [shape = 'f32[1]{0:T(128)S(6)}', space=smem, size = 0x200, scoped, tag = 'scoped memory for emotional_energy_forward.1']
  %s0 = inlined_call_operand.<no memory space> [shape: f32[1], index: 0, kind: input, shape index: {}]
  %s1 = inlined_call_operand.vmem [shape: f32[52,128], index: 1, kind: input, shape index: {}]
  %s2 = inlined_call_operand.vmem [shape: f32[1,128], index: 2, kind: input, shape index: {}]
  %s3 = inlined_call_operand.hbm [shape: f32[52,128], index: 3, kind: output, shape index: {}]
  %s4 = sld [smem:[#allocation0]]
  $region45: #{emotional_energy_forward.1} parent=0
    _
  %s6 = ssub.s32 1, %s4
  %s7 = scalar_select 0, %s6, %s4
  %8 = sst [smem:[#allocation2]] %s0
  $region1: #{emotional_energy_forward.1} parent=0
    #allocation3 [shape = 'u8[16384]{0}', space=vmem, size = 0x4000, scoped, tag = 'output window, operand 0']
    #allocation4 [shape = 's32[2]{0}', space=sflag, size = 0x8, scoped, tag = 'scoped memory for emotional_energy_forward.1']
    %9 = vsyncpa [#allocation4], 0
    %s10 = scalar_lea.sflag [#allocation4], 1
    %11 = vsyncpa %s10, 0
    loop: start=0, step=1, limit=6
    $region2: #{emotional_energy_forward.1} parent=1 // loop_pre_header
      _
    $region3: #{emotional_energy_forward.1} parent=1 // loop_header
      %s13 = sphi 0, %s17
      %p14 = scmp.ge.s32.totalorder %s13, 6
      %s21 = sphi 0, %s21
      %s23 = sphi 0, %s21
      %s24 = sphi 0, %s23
      %s38 = sphi 0, %s24
      %s44 = sphi 0, %s46
      %s47 = sphi 0, %s44
      %s48 = sphi 0, %s47
      %s64 = sphi 0, %s48
      %s68 = sphi 0, %s68
      %s70 = sphi 0, %s68
      %s71 = sphi 0, %s70
      %s85 = sphi 0, %s71
      %s91 = sphi 0, %s93
      %s94 = sphi 0, %s91
      %s95 = sphi 0, %s94
      %s111 = sphi 0, %s95
    $region4: #{emotional_energy_forward.1} parent=1 // loop_header_branch
      %16 = sbr.rel (%p14) target = $region8
    $region5: #{emotional_energy_forward.1} parent=1 // loop_body
      %s18 = ssub.s32 %s13, 1
      %s19 = ssub.s32 %s13, 2
      %s20 = sadd.s32 %s13, 1
      %s22 = sadd.s32 %s21, 1
      %p25 = scmp.eq.s32.totalorder %s13, 3
      %p26 = scmp.ne.s32.totalorder %s21, %s23
      %p27 = scmp.eq.s32.totalorder %s13, 0
      %p28 = por %p26, %p27
      %p29 = scmp.ne.s32.totalorder %s21, %s23
      %p30 = scmp.eq.s32.totalorder %s18, 3
      %p31 = por %p29, %p30
      %p32 = scmp.ne.s32.totalorder %s23, %s24
      %p33 = scmp.eq.s32.totalorder %s18, 0
      %p34 = por %p32, %p33
      %p35 = scmp.ne.s32.totalorder %s23, %s24
      %p36 = scmp.eq.s32.totalorder %s19, 3
      %p37 = por %p35, %p36
      %p39 = scmp.ne.s32.totalorder %s24, %s38
      %p40 = scmp.eq.s32.totalorder %s19, 0
      %p41 = por %p39, %p40
      %s42 = ssub.s32 %s13, %s20
      %p43 = scmp.eq.s32.totalorder %s42, 0
      %s45 = sadd.s32 %s44, 1
      %s46 = scalar_select %p43, %s44, %s45
      %p49 = pneg %p43
      %p50 = scmp.eq.s32.totalorder %s13, 3
      %p51 = por %p49, %p50
      %p52 = scmp.ne.s32.totalorder %s44, %s47
      %p53 = scmp.eq.s32.totalorder %s13, 0
      %p54 = por %p52, %p53
      %p55 = scmp.ne.s32.totalorder %s44, %s47
      %p56 = scmp.eq.s32.totalorder %s18, 3
      %p57 = por %p55, %p56
      %p58 = scmp.ne.s32.totalorder %s47, %s48
      %p59 = scmp.eq.s32.totalorder %s18, 0
      %p60 = por %p58, %p59
      %p61 = scmp.ne.s32.totalorder %s47, %s48
      %p62 = scmp.eq.s32.totalorder %s19, 3
      %p63 = por %p61, %p62
      %p65 = scmp.ne.s32.totalorder %s48, %s64
      %p66 = scmp.eq.s32.totalorder %s19, 0
      %p67 = por %p65, %p66
      %s69 = sadd.s32 %s68, 1
      %p72 = scmp.eq.s32.totalorder %s13, 3
      %p73 = scmp.ne.s32.totalorder %s68, %s70
      %p74 = scmp.eq.s32.totalorder %s13, 0
      %p75 = por %p73, %p74
      %p76 = scmp.ne.s32.totalorder %s68, %s70
      %p77 = scmp.eq.s32.totalorder %s18, 3
      %p78 = por %p76, %p77
      %p79 = scmp.ne.s32.totalorder %s70, %s71
      %p80 = scmp.eq.s32.totalorder %s18, 0
      %p81 = por %p79, %p80
      %p82 = scmp.ne.s32.totalorder %s70, %s71
      %p83 = scmp.eq.s32.totalorder %s19, 3
      %p84 = por %p82, %p83
      %p86 = scmp.ne.s32.totalorder %s71, %s85
      %p87 = scmp.eq.s32.totalorder %s19, 0
      %p88 = por %p86, %p87
      %s89 = ssub.s32 %s13, %s20
      %p90 = scmp.eq.s32.totalorder %s89, 0
      %s92 = sadd.s32 %s91, 1
      %s93 = scalar_select %p90, %s91, %s92
      %p96 = pneg %p90
      %p97 = scmp.eq.s32.totalorder %s13, 3
      %p98 = por %p96, %p97
      %p99 = scmp.ne.s32.totalorder %s91, %s94
      %p100 = scmp.eq.s32.totalorder %s13, 0
      %p101 = por %p99, %p100
      %p102 = scmp.ne.s32.totalorder %s91, %s94
      %p103 = scmp.eq.s32.totalorder %s18, 3
      %p104 = por %p102, %p103
      %p105 = scmp.ne.s32.totalorder %s94, %s95
      %p106 = scmp.eq.s32.totalorder %s18, 0
      %p107 = por %p105, %p106
      %p108 = scmp.ne.s32.totalorder %s94, %s95
      %p109 = scmp.eq.s32.totalorder %s19, 3
      %p110 = por %p108, %p109
      %p112 = scmp.ne.s32.totalorder %s95, %s111
      %p113 = scmp.eq.s32.totalorder %s19, 0
      %p114 = por %p112, %p113
      %p115 = scmp.le.s32.totalorder 1, %s13
      %p116 = scmp.lt.s32.totalorder %s13, 5
      %p117 = pnand %p115, %p116
      %p118 = pneg %p117
      // Predicated region
      $region9: #{emotional_energy_forward.1} parent=5 // pred_check
        _
      $region10: #{emotional_energy_forward.1} parent=5 // pred_check_branch
        %120 = sbr.rel (%p117) target = $region12
      $region11: #{emotional_energy_forward.1} parent=5 // pred_region
        %s121 = ssub.s32 %s13, 1
        // Predicated region
        $region13: #{emotional_energy_forward.1} parent=11 // pred_check
          %p122 = pneg %p34
        $region14: #{emotional_energy_forward.1} parent=11 // pred_check_branch
          %124 = sbr.rel (%p122) target = $region16
        $region15: #{emotional_energy_forward.1} parent=11 // pred_region
          _
        $region16: #{emotional_energy_forward.1} parent=11 // pred_fallthru
          _
        // Predicated region
        $region17: #{emotional_energy_forward.1} parent=11 // pred_check
          %p125 = pneg %p81
        $region18: #{emotional_energy_forward.1} parent=11 // pred_check_branch
          %127 = sbr.rel (%p125) target = $region20
        $region19: #{emotional_energy_forward.1} parent=11 // pred_region
          _
        $region20: #{emotional_energy_forward.1} parent=11 // pred_fallthru
          _
      $region12: #{emotional_energy_forward.1} parent=5 // pred_fallthru
        _
      %p128 = scmp.lt.s32.totalorder %s13, 4
      // Predicated region
      $region21: #{emotional_energy_forward.1} parent=5 // pred_check
        %p129 = pneg %p128
      $region22: #{emotional_energy_forward.1} parent=5 // pred_check_branch
        %131 = sbr.rel (%p129) target = $region24
      $region23: #{emotional_energy_forward.1} parent=5 // pred_region
        // Predicated region
        $region25: #{emotional_energy_forward.1} parent=23 // pred_check
          %p132 = pneg %p54
        $region26: #{emotional_energy_forward.1} parent=23 // pred_check_branch
          %134 = sbr.rel (%p132) target = $region28
        $region27: #{emotional_energy_forward.1} parent=23 // pred_region
          %s135 = smul.u32 2, %s13
          %s136 = ssub.s32 7, %s135
          %p137 = scmp.lt.s32.totalorder %s136, 2
          %s138 = scalar_select %p137, %s136, 2
          %s139 = smul.u32 128, %s138
          %p140 = scmp.lt.s32.totalorder %s135, 6
          %s141 = scalar_select %p140, %s135, 6
          %s142 = smul.addr %s141, 8
          %s143 = scalar_lea.vmem %s1, %s142
          %s144 = smul.u32 2, %s13
          %s145 = ssub.s32 7, %s144
          %p146 = scmp.lt.s32.totalorder %s145, 2
          %s147 = scalar_select %p146, %s145, 2
          %s148 = smul.u32 128, %s147
        $region28: #{emotional_energy_forward.1} parent=23 // pred_fallthru
          _
      $region24: #{emotional_energy_forward.1} parent=5 // pred_fallthru
        _
      %p149 = scmp.le.s32.totalorder 1, %s13
      %p150 = scmp.lt.s32.totalorder %s13, 5
      %p151 = pnand %p149, %p150
      %p152 = pneg %p151
      // Predicated region
      $region29: #{emotional_energy_forward.1} parent=5 // pred_check
        _
      $region30: #{emotional_energy_forward.1} parent=5 // pred_check_branch
        %154 = sbr.rel (%p151) target = $region32
      $region31: #{emotional_energy_forward.1} parent=5 // pred_region
        %s155 = ssub.s32 %s13, 1
        %p156 = pneg %p34
        %p157 = pneg %p31
        %s158 = smul.u32 2, %s18
        %s159 = ssub.s32 7, %s158
        %p160 = scmp.lt.s32.totalorder %s159, 2
        %s161 = scalar_select %p160, %s159, 2
        %s162 = smul.u32 128, %s161
        %p163 = scmp.lt.s32.totalorder %s158, 6
        %s164 = scalar_select %p163, %s158, 6
        %s165 = smul.addr %s164, 8
        %s166 = scalar_lea.vmem %s1, %s165
        %p167 = pneg %p60
        %p168 = pneg %p57
        %p169 = pneg %p81
        %p170 = pneg %p78
        %p171 = pneg %p107
        %p172 = pneg %p104
        %s173 = sand.u32 %s94, 1
        %s174 = scalar_lea.sflag [#allocation4], %s173
        %s175 = sand.u32 %s94, 1
        %s176 = smul.addr %s175, 16
        %s177 = scalar_lea.vmem [#allocation3], %s176
        %s178 = smul.u32 2, %s18
        %s179 = ssub.s32 7, %s178
        %p180 = scmp.lt.s32.totalorder %s179, 2
        %s181 = scalar_select %p180, %s179, 2
        %s182 = smul.u32 128, %s181
        %p183 = scmp.lt.s32.totalorder %s178, 6
        %s184 = scalar_select %p183, %s178, 6
        %s185 = smul.addr %s184, 8
        %s186 = scalar_lea.vmem %s1, %s185
        %s187 = smul.u32 2, %s18
        %s188 = ssub.s32 7, %s187
        %p189 = scmp.lt.s32.totalorder %s188, 2
        %s190 = scalar_select %p189, %s188, 2
        %s191 = smul.u32 128, %s190
        %s192 = smul.u32 2, %s18
        %s193 = ssub.s32 7, %s192
        %p194 = scmp.lt.s32.totalorder %s193, 2
        %s195 = scalar_select %p194, %s193, 2
        %s196 = smul.u32 128, %s195
        %s197 = sld [smem:[#allocation2]]
        %v198 = vld [vmem:[%s186] sm:$0xff]
        %v199 = vld [vmem:[%s186 + $0x8] sm:$0xff]
        %v200 = vld [vmem:[%s2] sm:$0x1]
        %v201 = vstv %s197
        %v202 = vmul.f32 %v198, %v201
        %v203 = vmul.f32 %v199, %v201
        %v205 = vlaneseq
        %v206 = vshrl.u32 %v205, 7
        %v207 = vsub.s32 0, %v206
        %v208 = vrot.slane %v200, %v207
        %v210 = vadd.f32 %v202, %v208
        %v211 = vadd.f32 %v203, %v208
        %212 = vst [vmem:[%s177] sm:$0xff] %v210
        %213 = vst [vmem:[%s177 + $0x8] sm:$0xff] %v211
        %s214 = sand.u32 %s94, 1
        %s215 = scalar_lea.sflag [#allocation4], %s214
        %s216 = sand.u32 %s94, 1
        %s217 = smul.addr %s216, 16
        %s218 = scalar_lea.vmem [#allocation3], %s217
        // Predicated region
        $region33: #{emotional_energy_forward.1} parent=31 // pred_check
          %p219 = pneg %p104
        $region34: #{emotional_energy_forward.1} parent=31 // pred_check_branch
          %221 = sbr.rel (%p219) target = $region36
        $region35: #{emotional_energy_forward.1} parent=31 // pred_region
          %s222 = smul.u32 2, %s18
          %s223 = ssub.s32 7, %s222
          %p224 = scmp.lt.s32.totalorder %s223, 2
          %s225 = scalar_select %p224, %s223, 2
          %s226 = smul.u32 128, %s225
          %s228 = ssub.s32 256, %s226
          %229 = vsyncadd %s215, %s228
          %p230 = scmp.ne.s32.totalorder 0, %s226
          %s231 = smul.addr %s222, 128
          %s232 = scalar_lea.hbm %s3, %s231
          %s233 = smul.u32 8, %s225
          %s234 = sshll.u32 %s218, 4
          %s235 = int_to_ptr.vmem [resolvable:$true] %s234
          %s236 = sshll.u32 %s233, 4
          %240 = dma.vmem_to_hbm [thread:$0]  (%p230), %s235, %s236, %s232, %s215, 128, 128, 8
        $region36: #{emotional_energy_forward.1} parent=31 // pred_fallthru
          _
      $region32: #{emotional_energy_forward.1} parent=5 // pred_fallthru
        _
      %p241 = scmp.le.s32.totalorder 2, %s13
      // Predicated region
      $region37: #{emotional_energy_forward.1} parent=5 // pred_check
        %p242 = pneg %p241
      $region38: #{emotional_energy_forward.1} parent=5 // pred_check_branch
        %244 = sbr.rel (%p242) target = $region40
      $region39: #{emotional_energy_forward.1} parent=5 // pred_region
        %s245 = ssub.s32 %s13, 2
        // Predicated region
        $region41: #{emotional_energy_forward.1} parent=39 // pred_check
          %p246 = pneg %p110
        $region42: #{emotional_energy_forward.1} parent=39 // pred_check_branch
          %248 = sbr.rel (%p246) target = $region44
        $region43: #{emotional_energy_forward.1} parent=39 // pred_region
          %s249 = sand.u32 %s95, 1
          %s250 = scalar_lea.sflag [#allocation4], %s249
          %s251 = sand.u32 %s95, 1
          %s252 = smul.addr %s251, 16
          %s253 = scalar_lea.vmem [#allocation3], %s252
          %254 = dma.done %s250, 256
        $region44: #{emotional_energy_forward.1} parent=39 // pred_fallthru
          _
      $region40: #{emotional_energy_forward.1} parent=5 // pred_fallthru
        _
    $region6: #{emotional_energy_forward.1} parent=1 // loop_footer
      %s17 = sadd.s32 1, %s13
    $region7: #{emotional_energy_forward.1} parent=1 // loop_footer_branch
      %12 = sbr.rel target = $region3
    $region8: #{emotional_energy_forward.1} parent=1 // loop_exit
      _
    %255 = vsyncpa [#allocation4], 1
    %s256 = scalar_lea.sflag [#allocation4], 1
    %257 = vsyncpa %s256, 1

</llo_original>
